<compile_context>
chip_gen: v5e
topology: v5e:2x2
jax: 0.10.0
libtpu: 0.0.40
codegen_flags: <defaults>
</compile_context>

<pallas_src>
import functools
import math

import jax
import jax.numpy as jnp
from jax.experimental import pallas as pl
from jax.experimental.pallas import tpu as pltpu


def _round_up(x, m):
    return ((x + m - 1) // m) * m


def _gcn_kernel(h_ref, adj_ref, w_ref, b_ref, o_ref, acc_ref, *, f_in, mxu_dtype):
    """One (row-tile i, col-tile k) grid step.

    h_ref   : [tk, F_in_pad]        hidden with a ones column at index f_in
    adj_ref : [tm, tk]              adjacency tile (bf16; exact for 0/1)
    w_ref   : [F_in_pad, F_out_pad] weight (rows >= f_in are zero)
    b_ref   : [1, F_out_pad]        bias (f32, zero padded)
    o_ref   : [tm, F_out_pad]       output tile (f32)
    acc_ref : [tm, F_in_pad]        f32 accumulator for adj @ [hidden | 1]
    """
    k = pl.program_id(1)

    @pl.when(k == 0)
    def _():
        acc_ref[...] = jnp.zeros_like(acc_ref)

    # Partial adj @ [hidden | 1] over this column block (MXU, f32 accumulate).
    # Column `f_in` of the product accumulates the row degree (ones column).
    acc_ref[...] += jnp.dot(adj_ref[...].astype(mxu_dtype), h_ref[...],
                            preferred_element_type=jnp.float32)

    @pl.when(k == pl.num_programs(1) - 1)
    def _():
        ah = acc_ref[...]                               # [tm, F_in_pad]
        denom = ah[:, f_in:f_in + 1] + 1.0              # row degree + 1 -> [tm, 1]
        # EUP approx reciprocal + one Newton refinement (~f32 accuracy).
        inv = pl.reciprocal(denom, approx=True)
        inv = inv * (2.0 - denom * inv)
        # ((adj @ hidden) / denom) @ W; the degree column multiplies zero rows
        # of the padded weight, so it contributes nothing.
        out = jnp.dot((ah * inv).astype(mxu_dtype), w_ref[...],
                      preferred_element_type=jnp.float32)
        o_ref[...] = (out + b_ref[...]).astype(o_ref.dtype)


def _vmem_budget_bytes():
    # 75% of per-core VMEM capacity (headroom for compiler scratch); if the
    # query is unavailable, assume the smallest generation (v7x: 64 MiB / TC).
    try:
        cap = int(pltpu.get_tpu_info().vmem_capacity_bytes)
    except Exception:
        cap = 64 * 1024 * 1024
    return max(32 * 1024 * 1024, (cap * 3) // 4)


def _tile_vmem_bytes(tm, tk, f_in_pad, f_out_pad, adj_bytes, io_bytes):
    return (2 * tm * tk * adj_bytes                 # adj tile (double-buffered)
            + 2 * tk * f_in_pad * io_bytes          # hidden tile (double-buffered)
            + 2 * f_in_pad * f_out_pad * io_bytes   # weight (const index)
            + 2 * f_out_pad * 4                     # bias
            + 2 * tm * f_out_pad * 4                # output tile (double-buffered)
            + tm * f_in_pad * 4)                    # f32 accumulator scratch


def _pick_tiles(n_pad, f_in_pad, f_out_pad, adj_bytes, io_bytes, budget):
    tms = [t for t in (1024, 512, 256, 128, 64, 32, 16) if n_pad % t == 0]
    multi = [t for t in tms if n_pad // t >= 2]
    if multi:                     # keep >=2 row tiles so v7x can use both TCs
        tms = multi
    tks = [t for t in (8192, 4096, 2048, 1024, 512, 256, 128) if n_pad % t == 0]
    best = None
    for tm in tms:
        for tk in tks:
            if _tile_vmem_bytes(tm, tk, f_in_pad, f_out_pad,
                                adj_bytes, io_bytes) <= budget:
                score = (tm * tk, tk, tm)
                if best is None or score > best[0]:
                    best = (score, tm, tk)
    if best is None:              # smallest tiles always fit in practice
        return tms[-1], tks[-1]
    return best[1], best[2]


def gcn_forward(hidden, adj, weight, bias=None, *, use_bf16_matmul=True):
    """output = (adj @ (hidden @ W)) / (adj.sum(1, keepdim=True) + 1) + b."""
    N, f_in = hidden.shape
    f_out = weight.shape[1]

    io_dtype = jnp.bfloat16 if use_bf16_matmul else jnp.float32
    io_bytes = 2 if use_bf16_matmul else 4
    adj_dtype, adj_bytes = jnp.bfloat16, 2   # 0/1 adjacency is exact in bf16
    # TODO(synk): stream adj as int8 (exact, 4x narrower than f32) with an
    # in-kernel int8->bf16 upcast once validated across target generations.

    n_pad = _round_up(N, 128)                # adj rows & cols (lane-friendly)
    f_in_pad = _round_up(f_in + 1, 128)      # +1 ones column -> degree via MXU
    f_out_pad = _round_up(f_out, 128)        # lane-dense output stores

    # hidden augmented with a ones column, zero padded.
    h_aug = jnp.zeros((n_pad, f_in_pad), io_dtype)
    h_aug = h_aug.at[:N, :f_in].set(hidden.astype(io_dtype))
    h_aug = h_aug.at[:N, f_in].set(jnp.ones((N,), io_dtype))

    adj_p = jnp.zeros((n_pad, n_pad), adj_dtype).at[:N, :N].set(
        adj.astype(adj_dtype))

    w_p = jnp.zeros((f_in_pad, f_out_pad), io_dtype).at[:f_in, :f_out].set(
        weight.astype(io_dtype))
    b_p = jnp.zeros((1, f_out_pad), jnp.float32)
    if bias is not None:
        b_p = b_p.at[0, :f_out].set(bias.astype(jnp.float32))

    budget = _vmem_budget_bytes()
    tm, tk = _pick_tiles(n_pad, f_in_pad, f_out_pad, adj_bytes, io_bytes, budget)
    grid = (n_pad // tm, n_pad // tk)        # reduction (adj columns) axis last

    out_padded = pl.pallas_call(
        functools.partial(_gcn_kernel, f_in=f_in, mxu_dtype=io_dtype),
        out_shape=jax.ShapeDtypeStruct((n_pad, f_out_pad), jnp.float32),
        grid_spec=pltpu.PrefetchScalarGridSpec(
            num_scalar_prefetch=0,
            grid=grid,
            in_specs=[
                pl.BlockSpec((tk, f_in_pad), lambda i, k: (k, 0)),        # hidden_aug
                pl.BlockSpec((tm, tk), lambda i, k: (i, k)),              # adj tile
                pl.BlockSpec((f_in_pad, f_out_pad), lambda i, k: (0, 0)), # weight
                pl.BlockSpec((1, f_out_pad), lambda i, k: (0, 0)),        # bias
            ],
            out_specs=pl.BlockSpec((tm, f_out_pad), lambda i, k: (i, 0)),
            scratch_shapes=[pltpu.VMEM((tm, f_in_pad), jnp.float32)],
        ),
        compiler_params=pltpu.CompilerParams(
            dimension_semantics=("parallel", "arbitrary"),
            vmem_limit_bytes=budget,
        ),
    )(h_aug, adj_p, w_p, b_p)

    # Slice off the row / lane padding.
    return out_padded[:N, :f_out]


if __name__ == "__main__":
    # Small, deterministic problem: N=16 nodes, in_features=32, out_features=64.
    N, in_features, out_features = 16, 32, 64

    key = jax.random.PRNGKey(0)
    k_h, k_adj, k_w, k_b = jax.random.split(key, 4)

    # Deterministic parameter init matching GCN.reset_parameters():
    #   stdv = 1 / sqrt(out_features);  uniform(-stdv, stdv)
    stdv = 1.0 / math.sqrt(out_features)
    weight = jax.random.uniform(
        k_w, (in_features, out_features), jnp.float32, minval=-stdv, maxval=stdv)
    bias = jax.random.uniform(
        k_b, (out_features,), jnp.float32, minval=-stdv, maxval=stdv)

    hidden = jax.random.normal(k_h, (N, in_features), jnp.float32)
    adj = (jax.random.uniform(k_adj, (N, N), jnp.float32) > 0.5).astype(jnp.float32)

    # Pure-JAX f32 reference.
    hw_ref = hidden @ weight
    denom_ref = jnp.sum(adj, axis=1, keepdims=True) + 1.0
    ref = (adj @ hw_ref) / denom_ref + bias

    # Default (bf16 MXU) path: adj is exact in bf16, hidden/weight are lossy,
    # so the tolerance is loosened accordingly.
    out = jax.block_until_ready(gcn_forward(hidden, adj, weight, bias))
    assert out.shape == (N, out_features)
    assert jnp.allclose(out, ref, atol=3e-2, rtol=3e-2), (
        "bf16 path mismatch vs reference, max abs err = "
        f"{float(jnp.max(jnp.abs(out - ref)))}")

    # f32 MXU path: tight check of the kernel semantics.
    out_f32 = jax.block_until_ready(
        gcn_forward(hidden, adj, weight, bias, use_bf16_matmul=False))
    assert jnp.allclose(out_f32, ref, atol=1e-4, rtol=1e-4), (
        "f32 path mismatch vs reference, max abs err = "
        f"{float(jnp.max(jnp.abs(out_f32 - ref)))}")

    print("KERNEL_OK")
</pallas_src>

<mosaic_0001>
module attributes {stable_mosaic.version = 11 : i64} {
  func.func @_gcn_kernel(%arg0: i32, %arg1: i32, %arg2: memref<128x128xbf16, #tpu.memory_space<vmem>>, %arg3: memref<64x128xbf16, #tpu.memory_space<vmem>>, %arg4: memref<128x128xbf16, #tpu.memory_space<vmem>>, %arg5: memref<1x128xf32, #tpu.memory_space<vmem>>, %arg6: memref<64x128xf32, #tpu.memory_space<vmem>>, %arg7: memref<64x128xf32, #tpu.memory_space<vmem>>) attributes {dimension_semantics = [#tpu.dimension_semantics<parallel>, #tpu.dimension_semantics<arbitrary>], iteration_bounds = array<i64: 2, 1>, scalar_prefetch = 0 : i64, scratch_operands = 1 : i64, tpu.core_type = #tpu.core_type<tc>, window_params = [{transform_indices = @transform_0, window_bounds = array<i64: 128, 128>}, {transform_indices = @transform_1, window_bounds = array<i64: 64, 128>}, {pipeline_mode = #tpu.pipeline_mode<synchronous>, transform_indices = @transform_2, window_bounds = array<i64: 128, 128>}, {pipeline_mode = #tpu.pipeline_mode<synchronous>, transform_indices = @transform_3, window_bounds = array<i64: 1, 128>}, {transform_indices = @transform_4, window_bounds = array<i64: 64, 128>}]} {
    %c0_i32 = arith.constant 0 : i32
    %0 = arith.cmpi eq, %arg1, %c0_i32 : i32
    %1 = arith.extui %0 : i1 to i32
    %c0_i32_0 = arith.constant 0 : i32
    %2 = arith.cmpi ne, %1, %c0_i32_0 : i32
    scf.if %2 {
      %cst_10 = arith.constant 0.000000e+00 : f32
      %12 = vector.broadcast %cst_10 : f32 to vector<64x128xf32>
      %c0_11 = arith.constant 0 : index
      %c0_12 = arith.constant 0 : index
      %13 = vector.load %arg7[%c0_11, %c0_12] : memref<64x128xf32, #tpu.memory_space<vmem>>, vector<64x128xf32>
      tpu.vector_store %arg7[%c0_11, %c0_12], %12 {strides = array<i32>} : memref<64x128xf32, #tpu.memory_space<vmem>>, vector<64x128xf32>,
    } else {
    }
    %c0 = arith.constant 0 : index
    %c0_1 = arith.constant 0 : index
    %3 = vector.load %arg7[%c0, %c0_1] : memref<64x128xf32, #tpu.memory_space<vmem>>, vector<64x128xf32>
    %c0_2 = arith.constant 0 : index
    %c0_3 = arith.constant 0 : index
    %4 = vector.load %arg3[%c0_2, %c0_3] : memref<64x128xbf16, #tpu.memory_space<vmem>>, vector<64x128xbf16>
    %c0_4 = arith.constant 0 : index
    %c0_5 = arith.constant 0 : index
    %5 = vector.load %arg2[%c0_4, %c0_5] : memref<128x128xbf16, #tpu.memory_space<vmem>>, vector<128x128xbf16>
    %cst = arith.constant dense<0.000000e+00> : vector<64x128xf32>
    %6 = tpu.matmul %4, %5, %cst {dimension_numbers = #tpu.dot_dimension_numbers<[1], [0], [0], [1], [0, 0, 1, 1], [], []>} : vector<64x128xbf16>, vector<128x128xbf16>, vector<64x128xf32> -> vector<64x128xf32>
    %7 = arith.addf %3, %6 : vector<64x128xf32>
    %c0_6 = arith.constant 0 : index
    %c0_7 = arith.constant 0 : index
    %8 = vector.load %arg7[%c0_6, %c0_7] : memref<64x128xf32, #tpu.memory_space<vmem>>, vector<64x128xf32>
    tpu.vector_store %arg7[%c0_6, %c0_7], %7 {strides = array<i32>} : memref<64x128xf32, #tpu.memory_space<vmem>>, vector<64x128xf32>,
    %c0_i32_8 = arith.constant 0 : i32
    %9 = arith.cmpi eq, %arg1, %c0_i32_8 : i32
    %10 = arith.extui %9 : i1 to i32
    %c0_i32_9 = arith.constant 0 : i32
    %11 = arith.cmpi ne, %10, %c0_i32_9 : i32
    scf.if %11 {
      %c0_10 = arith.constant 0 : index
      %c0_11 = arith.constant 0 : index
      %12 = vector.load %arg7[%c0_10, %c0_11] : memref<64x128xf32, #tpu.memory_space<vmem>>, vector<64x128xf32>
      %13 = vector.extract_strided_slice %12 {offsets = [0, 32], sizes = [64, 1], strides = [1, 1]} : vector<64x128xf32> to vector<64x1xf32>
      %cst_12 = arith.constant 1.000000e+00 : f32
      %14 = vector.broadcast %cst_12 : f32 to vector<64x1xf32>
      %15 = arith.addf %13, %14 : vector<64x1xf32>
      %16 = tpu.reciprocal %15 {approx = true} : vector<64x1xf32> -> vector<64x1xf32>
      %17 = arith.mulf %15, %16 : vector<64x1xf32>
      %cst_13 = arith.constant 2.000000e+00 : f32
      %18 = vector.broadcast %cst_13 : f32 to vector<64x1xf32>
      %19 = arith.subf %18, %17 : vector<64x1xf32>
      %20 = arith.mulf %16, %19 : vector<64x1xf32>
      %21 = vector.broadcast %20 : vector<64x1xf32> to vector<64x128xf32>
      %22 = arith.mulf %12, %21 : vector<64x128xf32>
      %23 = arith.truncf %22 : vector<64x128xf32> to vector<64x128xbf16>
      %c0_14 = arith.constant 0 : index
      %c0_15 = arith.constant 0 : index
      %24 = vector.load %arg4[%c0_14, %c0_15] : memref<128x128xbf16, #tpu.memory_space<vmem>>, vector<128x128xbf16>
      %cst_16 = arith.constant dense<0.000000e+00> : vector<64x128xf32>
      %25 = tpu.matmul %23, %24, %cst_16 {dimension_numbers = #tpu.dot_dimension_numbers<[1], [0], [0], [1], [0, 0, 1, 1], [], []>} : vector<64x128xbf16>, vector<128x128xbf16>, vector<64x128xf32> -> vector<64x128xf32>
      %c0_17 = arith.constant 0 : index
      %c0_18 = arith.constant 0 : index
      %26 = vector.load %arg5[%c0_17, %c0_18] : memref<1x128xf32, #tpu.memory_space<vmem>>, vector<1x128xf32>
      %27 = vector.broadcast %26 : vector<1x128xf32> to vector<64x128xf32>
      %28 = arith.addf %25, %27 : vector<64x128xf32>
      %c0_19 = arith.constant 0 : index
      %c0_20 = arith.constant 0 : index
      %29 = vector.load %arg6[%c0_19, %c0_20] : memref<64x128xf32, #tpu.memory_space<vmem>>, vector<64x128xf32>
      tpu.vector_store %arg6[%c0_19, %c0_20], %28 {strides = array<i32>} : memref<64x128xf32, #tpu.memory_space<vmem>>, vector<64x128xf32>,
    } else {
    }
    return
  }
  func.func @transform_0(%arg0: i32, %arg1: i32) -> (i32, i32) {
    %c0_i32 = arith.constant 0 : i32
    %c0_i32_0 = arith.constant 0 : i32
    return %arg1, %c0_i32 : i32, i32
  }
  func.func @transform_1(%arg0: i32, %arg1: i32) -> (i32, i32) {
    %c0_i32 = arith.constant 0 : i32
    return %arg0, %arg1 : i32, i32
  }
  func.func @transform_2(%arg0: i32, %arg1: i32) -> (i32, i32) {
    %c0_i32 = arith.constant 0 : i32
    %c0_i32_0 = arith.constant 0 : i32
    %c0_i32_1 = arith.constant 0 : i32
    return %c0_i32, %c0_i32_0 : i32, i32
  }
  func.func @transform_3(%arg0: i32, %arg1: i32) -> (i32, i32) {
    %c0_i32 = arith.constant 0 : i32
    %c0_i32_0 = arith.constant 0 : i32
    %c0_i32_1 = arith.constant 0 : i32
    return %c0_i32, %c0_i32_0 : i32, i32
  }
  func.func @transform_4(%arg0: i32, %arg1: i32) -> (i32, i32) {
    %c0_i32 = arith.constant 0 : i32
    %c0_i32_0 = arith.constant 0 : i32
    return %arg0, %c0_i32 : i32, i32
  }
}

</mosaic_0001>

<llo_original>
// kernel: tpu_custom_call.1
$region0: #{tpu_custom_call.1}
  #allocation0 [shape = 'u32[]', space=smem, size = 0x4, offset = 0x4, fixed_abs, tag = 'smem constant byte address 0x4 - core index']
  #allocation1 [shape = 'u32[72,128]{1,0:T(1,128)}', space=vmem, size = 0x9000, scoped, tag = 'internal scratch']
  #allocation2 [shape = 'f32[64,128]{1,0:T(8,128)}', space=vmem, size = 0x8000, scoped, tag = 'scratch operand']
  %s0 = inlined_call_operand.hbm [shape: bf16[128,128], index: 0, kind: input, shape index: {}]
  %s1 = inlined_call_operand.hbm [shape: bf16[128,128], index: 1, kind: input, shape index: {}]
  %s2 = inlined_call_operand.hbm [shape: bf16[128,128], index: 2, kind: input, shape index: {}]
  %s3 = inlined_call_operand.vmem [shape: f32[1,128], index: 3, kind: input, shape index: {}]
  %s4 = inlined_call_operand.hbm [shape: f32[128,128], index: 4, kind: output, shape index: {}]
  %s5 = sld [smem:[#allocation0]]
  $region69: #{tpu_custom_call.1} parent=0
    _
  %s7 = ssub.s32 1, %s5
  %s8 = scalar_select 0, %s7, %s5
  $region1: #{tpu_custom_call.1} parent=0
    #allocation3 [shape = 'u8[32768]{0}', space=vmem, size = 0x8000, scoped, tag = 'input window, operand 0, single buffered']
    #allocation4 [shape = 's32[2]{0}', space=sflag, size = 0x8, scoped, tag = 'scoped memory for tpu_custom_call.1']
    #allocation5 [shape = 's32[2]{0}', space=sflag, size = 0x8, scoped, tag = 'scoped memory for tpu_custom_call.1']
    #allocation6 [shape = 'u8[32768]{0}', space=vmem, size = 0x8000, scoped, tag = 'input window, operand 1']
    #allocation7 [shape = 's32[2]{0}', space=sflag, size = 0x8, scoped, tag = 'scoped memory for tpu_custom_call.1']
    #allocation8 [shape = 'u8[32768]{0}', space=vmem, size = 0x8000, scoped, tag = 'input window, operand 2, single buffered']
    #allocation9 [shape = 'u8[65536]{0}', space=vmem, size = 0x10000, scoped, tag = 'output window, operand 0']
    %9 = vsyncpa [#allocation4], 0
    %10 = vsyncpa [#allocation7], 0
    %s11 = scalar_lea.sflag [#allocation7], 1
    %12 = vsyncpa %s11, 0
    %13 = vsyncpa [#allocation5], 0
    %s14 = scalar_lea.sflag [#allocation5], 1
    %15 = vsyncpa %s14, 0
    loop: start=0, step=1, limit=4
    $region2: #{tpu_custom_call.1} parent=1 // loop_pre_header
      _
    $region3: #{tpu_custom_call.1} parent=1 // loop_header
      %s17 = sphi 0, %s21
      %p18 = scmp.ge.s32.totalorder %s17, 4
      %s24 = sphi 0, %s36
      %s25 = sphi 0, %s32
      %s26 = sphi 0, %s24
      %s27 = sphi 0, %s25
      %s28 = sphi 0, %s26
      %s29 = sphi 0, %s27
      %s39 = sphi 0, %s41
      %s42 = sphi 0, %s39
      %s43 = sphi 0, %s42
      %s59 = sphi 0, %s43
      %s67 = sphi 0, %s69
      %s70 = sphi 0, %s67
      %s71 = sphi 0, %s70
      %s87 = sphi 0, %s71
      %s91 = sphi 0, %s91
      %s93 = sphi 0, %s91
      %s94 = sphi 0, %s93
      %s108 = sphi 0, %s94
      %s112 = sphi 0, %s112
      %s114 = sphi 0, %s112
      %s115 = sphi 0, %s114
      %s129 = sphi 0, %s115
      %s135 = sphi 0, %s137
      %s138 = sphi 0, %s135
      %s139 = sphi 0, %s138
      %s155 = sphi 0, %s139
    $region4: #{tpu_custom_call.1} parent=1 // loop_header_branch
      %20 = sbr.rel (%p18) target = $region8
    $region5: #{tpu_custom_call.1} parent=1 // loop_body
      %s22 = ssub.s32 %s17, 1
      %s23 = ssub.s32 %s17, 2
      %s30 = sadd.s32 1, %s25
      %p31 = scmp.ge.s32.totalorder %s30, 1
      %s32 = scalar_select %p31, 0, %s30
      %s33 = sadd.s32 1, %s24
      %s34 = scalar_select %p31, %s33, %s24
      %p35 = scmp.ge.s32.totalorder %s34, 2
      %s36 = scalar_select %p35, 0, %s34
      %s37 = ssub.s32 %s25, %s32
      %p38 = scmp.eq.s32.totalorder %s37, 0
      %s40 = sadd.s32 %s39, 1
      %s41 = scalar_select %p38, %s39, %s40
      %p44 = pneg %p38
      %p45 = scmp.eq.s32.totalorder %s17, 1
      %p46 = por %p44, %p45
      %p47 = scmp.ne.s32.totalorder %s39, %s42
      %p48 = scmp.eq.s32.totalorder %s17, 0
      %p49 = por %p47, %p48
      %p50 = scmp.ne.s32.totalorder %s39, %s42
      %p51 = scmp.eq.s32.totalorder %s22, 1
      %p52 = por %p50, %p51
      %p53 = scmp.ne.s32.totalorder %s42, %s43
      %p54 = scmp.eq.s32.totalorder %s22, 0
      %p55 = por %p53, %p54
      %p56 = scmp.ne.s32.totalorder %s42, %s43
      %p57 = scmp.eq.s32.totalorder %s23, 1
      %p58 = por %p56, %p57
      %p60 = scmp.ne.s32.totalorder %s43, %s59
      %p61 = scmp.eq.s32.totalorder %s23, 0
      %p62 = por %p60, %p61
      %s63 = ssub.s32 %s24, %s36
      %s64 = ssub.s32 %s25, %s32
      %s65 = sor.u32 %s63, %s64
      %p66 = scmp.eq.s32.totalorder %s65, 0
      %s68 = sadd.s32 %s67, 1
      %s69 = scalar_select %p66, %s67, %s68
      %p72 = pneg %p66
      %p73 = scmp.eq.s32.totalorder %s17, 1
      %p74 = por %p72, %p73
      %p75 = scmp.ne.s32.totalorder %s67, %s70
      %p76 = scmp.eq.s32.totalorder %s17, 0
      %p77 = por %p75, %p76
      %p78 = scmp.ne.s32.totalorder %s67, %s70
      %p79 = scmp.eq.s32.totalorder %s22, 1
      %p80 = por %p78, %p79
      %p81 = scmp.ne.s32.totalorder %s70, %s71
      %p82 = scmp.eq.s32.totalorder %s22, 0
      %p83 = por %p81, %p82
      %p84 = scmp.ne.s32.totalorder %s70, %s71
      %p85 = scmp.eq.s32.totalorder %s23, 1
      %p86 = por %p84, %p85
      %p88 = scmp.ne.s32.totalorder %s71, %s87
      %p89 = scmp.eq.s32.totalorder %s23, 0
      %p90 = por %p88, %p89
      %s92 = sadd.s32 %s91, 1
      %p95 = scmp.eq.s32.totalorder %s17, 1
      %p96 = scmp.ne.s32.totalorder %s91, %s93
      %p97 = scmp.eq.s32.totalorder %s17, 0
      %p98 = por %p96, %p97
      %p99 = scmp.ne.s32.totalorder %s91, %s93
      %p100 = scmp.eq.s32.totalorder %s22, 1
      %p101 = por %p99, %p100
      %p102 = scmp.ne.s32.totalorder %s93, %s94
      %p103 = scmp.eq.s32.totalorder %s22, 0
      %p104 = por %p102, %p103
      %p105 = scmp.ne.s32.totalorder %s93, %s94
      %p106 = scmp.eq.s32.totalorder %s23, 1
      %p107 = por %p105, %p106
      %p109 = scmp.ne.s32.totalorder %s94, %s108
      %p110 = scmp.eq.s32.totalorder %s23, 0
      %p111 = por %p109, %p110
      %s113 = sadd.s32 %s112, 1
      %p116 = scmp.eq.s32.totalorder %s17, 1
      %p117 = scmp.ne.s32.totalorder %s112, %s114
      %p118 = scmp.eq.s32.totalorder %s17, 0
      %p119 = por %p117, %p118
      %p120 = scmp.ne.s32.totalorder %s112, %s114
      %p121 = scmp.eq.s32.totalorder %s22, 1
      %p122 = por %p120, %p121
      %p123 = scmp.ne.s32.totalorder %s114, %s115
      %p124 = scmp.eq.s32.totalorder %s22, 0
      %p125 = por %p123, %p124
      %p126 = scmp.ne.s32.totalorder %s114, %s115
      %p127 = scmp.eq.s32.totalorder %s23, 1
      %p128 = por %p126, %p127
      %p130 = scmp.ne.s32.totalorder %s115, %s129
      %p131 = scmp.eq.s32.totalorder %s23, 0
      %p132 = por %p130, %p131
      %s133 = ssub.s32 %s24, %s36
      %p134 = scmp.eq.s32.totalorder %s133, 0
      %s136 = sadd.s32 %s135, 1
      %s137 = scalar_select %p134, %s135, %s136
      %p140 = pneg %p134
      %p141 = scmp.eq.s32.totalorder %s17, 1
      %p142 = por %p140, %p141
      %p143 = scmp.ne.s32.totalorder %s135, %s138
      %p144 = scmp.eq.s32.totalorder %s17, 0
      %p145 = por %p143, %p144
      %p146 = scmp.ne.s32.totalorder %s135, %s138
      %p147 = scmp.eq.s32.totalorder %s22, 1
      %p148 = por %p146, %p147
      %p149 = scmp.ne.s32.totalorder %s138, %s139
      %p150 = scmp.eq.s32.totalorder %s22, 0
      %p151 = por %p149, %p150
      %p152 = scmp.ne.s32.totalorder %s138, %s139
      %p153 = scmp.eq.s32.totalorder %s23, 1
      %p154 = por %p152, %p153
      %p156 = scmp.ne.s32.totalorder %s139, %s155
      %p157 = scmp.eq.s32.totalorder %s23, 0
      %p158 = por %p156, %p157
      %p159 = scmp.le.s32.totalorder 1, %s17
      %p160 = scmp.lt.s32.totalorder %s17, 3
      %p161 = pnand %p159, %p160
      %p162 = pneg %p161
      // Predicated region
      $region9: #{tpu_custom_call.1} parent=5 // pred_check
        _
      $region10: #{tpu_custom_call.1} parent=5 // pred_check_branch
        %164 = sbr.rel (%p161) target = $region12
      $region11: #{tpu_custom_call.1} parent=5 // pred_region
        %s165 = ssub.s32 %s17, 1
        // Predicated region
        $region13: #{tpu_custom_call.1} parent=11 // pred_check
          %p166 = pneg %p55
        $region14: #{tpu_custom_call.1} parent=11 // pred_check_branch
          %168 = sbr.rel (%p166) target = $region16
        $region15: #{tpu_custom_call.1} parent=11 // pred_region
          %s169 = smul.u32 16, %s27
          %171 = vsyncadd [#allocation4], 0
          %s172 = smul.addr %s169, 4
          %s173 = scalar_lea.hbm %s0, %s172
          %s174 = sshll.u32 %s173, 4
          %s175 = int_to_ptr.hbm [resolvable:$true] %s174
          %s176 = sshll.u32 [#allocation3], 4
          %s177 = int_to_ptr.vmem [resolvable:$true] %s176
          %182 = dma.hbm_to_vmem [thread:$0]  %s175, 1024, %s177, [#allocation4], 64, 64, 4
        $region16: #{tpu_custom_call.1} parent=11 // pred_fallthru
          _
        // Predicated region
        $region17: #{tpu_custom_call.1} parent=11 // pred_check
          %p183 = pneg %p104
        $region18: #{tpu_custom_call.1} parent=11 // pred_check_branch
          %185 = sbr.rel (%p183) target = $region20
        $region19: #{tpu_custom_call.1} parent=11 // pred_region
          %187 = vsyncadd [#allocation7], 0
          %s188 = sshll.u32 %s2, 4
          %s189 = int_to_ptr.hbm [resolvable:$true] %s188
          %s190 = sshll.u32 [#allocation8], 4
          %s191 = int_to_ptr.vmem [resolvable:$true] %s190
          %196 = dma.hbm_to_vmem [thread:$0]  %s189, 1024, %s191, [#allocation7], 64, 64, 4
        $region20: #{tpu_custom_call.1} parent=11 // pred_fallthru
          _
        // Predicated region
        $region21: #{tpu_custom_call.1} parent=11 // pred_check
          %p197 = pneg %p125
        $region22: #{tpu_custom_call.1} parent=11 // pred_check_branch
          %199 = sbr.rel (%p197) target = $region24
        $region23: #{tpu_custom_call.1} parent=11 // pred_region
          _
        $region24: #{tpu_custom_call.1} parent=11 // pred_fallthru
          _
      $region12: #{tpu_custom_call.1} parent=5 // pred_fallthru
        _
      %p200 = scmp.lt.s32.totalorder %s17, 2
      // Predicated region
      $region25: #{tpu_custom_call.1} parent=5 // pred_check
        %p201 = pneg %p200
      $region26: #{tpu_custom_call.1} parent=5 // pred_check_branch
        %203 = sbr.rel (%p201) target = $region28
      $region27: #{tpu_custom_call.1} parent=5 // pred_region
        // Predicated region
        $region29: #{tpu_custom_call.1} parent=27 // pred_check
          %p204 = pneg %p77
        $region30: #{tpu_custom_call.1} parent=27 // pred_check_branch
          %206 = sbr.rel (%p204) target = $region32
        $region31: #{tpu_custom_call.1} parent=27 // pred_region
          %s207 = sand.u32 %s17, 1
          %s208 = scalar_lea.sflag [#allocation7], %s207
          %s209 = sand.u32 %s67, 1
          %s210 = smul.addr %s209, 32
          %s211 = scalar_lea.vmem [#allocation6], %s210
          %s212 = smul.u32 8, %s24
          %214 = vsyncadd %s208, 0
          %s215 = sadd.s32 %s25, %s212
          %s216 = smul.addr %s215, 4
          %s217 = scalar_lea.hbm %s1, %s216
          %s218 = sshll.u32 %s217, 4
          %s219 = int_to_ptr.hbm [resolvable:$true] %s218
          %s220 = sshll.u32 %s211, 4
          %s221 = int_to_ptr.vmem [resolvable:$true] %s220
          %226 = dma.hbm_to_vmem [thread:$0]  %s219, 512, %s221, %s208, 64, 64, 4
        $region32: #{tpu_custom_call.1} parent=27 // pred_fallthru
          _
      $region28: #{tpu_custom_call.1} parent=5 // pred_fallthru
        _
      %p227 = scmp.le.s32.totalorder 1, %s17
      %p228 = scmp.lt.s32.totalorder %s17, 3
      %p229 = pnand %p227, %p228
      %p230 = pneg %p229
      // Predicated region
      $region33: #{tpu_custom_call.1} parent=5 // pred_check
        _
      $region34: #{tpu_custom_call.1} parent=5 // pred_check_branch
        %232 = sbr.rel (%p229) target = $region36
      $region35: #{tpu_custom_call.1} parent=5 // pred_region
        %s233 = ssub.s32 %s17, 1
        // Predicated region
        $region37: #{tpu_custom_call.1} parent=35 // pred_check
          %p234 = pneg %p55
        $region38: #{tpu_custom_call.1} parent=35 // pred_check_branch
          %236 = sbr.rel (%p234) target = $region40
        $region39: #{tpu_custom_call.1} parent=35 // pred_region
          %238 = dma.done [#allocation4], 1024
        $region40: #{tpu_custom_call.1} parent=35 // pred_fallthru
          _
        %s239 = sand.u32 %s22, 1
        %s240 = scalar_lea.sflag [#allocation7], %s239
        %s241 = sand.u32 %s70, 1
        %s242 = smul.addr %s241, 32
        %s243 = scalar_lea.vmem [#allocation6], %s242
        // Predicated region
        $region41: #{tpu_custom_call.1} parent=35 // pred_check
          %p244 = pneg %p83
        $region42: #{tpu_custom_call.1} parent=35 // pred_check_branch
          %246 = sbr.rel (%p244) target = $region44
        $region43: #{tpu_custom_call.1} parent=35 // pred_region
          %248 = dma.done %s240, 512
        $region44: #{tpu_custom_call.1} parent=35 // pred_fallthru
          _
        // Predicated region
        $region45: #{tpu_custom_call.1} parent=35 // pred_check
          %p249 = pneg %p104
        $region46: #{tpu_custom_call.1} parent=35 // pred_check_branch
          %251 = sbr.rel (%p249) target = $region48
        $region47: #{tpu_custom_call.1} parent=35 // pred_region
          %253 = dma.done [#allocation7], 1024
        $region48: #{tpu_custom_call.1} parent=35 // pred_fallthru
          _
        %p254 = pneg %p55
        %p255 = pneg %p52
        %s256 = sand.u32 %s22, 1
        %s257 = scalar_lea.sflag [#allocation7], %s256
        %s258 = sand.u32 %s70, 1
        %s259 = smul.addr %s258, 32
        %s260 = scalar_lea.vmem [#allocation6], %s259
        %p261 = pneg %p83
        %p262 = pneg %p80
        %p263 = pneg %p104
        %p264 = pneg %p101
        %p265 = pneg %p125
        %p266 = pneg %p122
        %p267 = pneg %p151
        %p268 = pneg %p148
        %s269 = sand.u32 %s138, 1
        %s270 = scalar_lea.sflag [#allocation5], %s269
        %s271 = sand.u32 %s138, 1
        %s272 = smul.addr %s271, 64
        %s273 = scalar_lea.vmem [#allocation9], %s272
        %s274 = smul.u32 16, %s27
        %s275 = smul.u32 8, %s26
        %s276 = smul.u32 8, %s26
        %p277 = scmp.eq.s32.totalorder %s27, 0
        // Predicated region
        $region49: #{tpu_custom_call.1} parent=35 // pred_check
          %p278 = pneg %p277
        $region50: #{tpu_custom_call.1} parent=35 // pred_check_branch
          %280 = sbr.rel (%p278) target = $region52
        $region51: #{tpu_custom_call.1} parent=35 // pred_region
          %281 = vst [vmem:[#allocation2] sm:$0xff] 0.0
          %282 = vst [vmem:[#allocation2 + $0x8] sm:$0xff] 0.0
          %283 = vst [vmem:[#allocation2 + $0x10] sm:$0xff] 0.0
          %284 = vst [vmem:[#allocation2 + $0x18] sm:$0xff] 0.0
          %285 = vst [vmem:[#allocation2 + $0x20] sm:$0xff] 0.0
          %286 = vst [vmem:[#allocation2 + $0x28] sm:$0xff] 0.0
          %287 = vst [vmem:[#allocation2 + $0x30] sm:$0xff] 0.0
          %288 = vst [vmem:[#allocation2 + $0x38] sm:$0xff] 0.0
        $region52: #{tpu_custom_call.1} parent=35 // pred_fallthru
          _
        %v289 = vld [vmem:[#allocation2] sm:$0xff]
        %v290 = vld [vmem:[#allocation2 + $0x8] sm:$0xff]
        %v291 = vld [vmem:[#allocation2 + $0x10] sm:$0xff]
        %v292 = vld [vmem:[#allocation2 + $0x18] sm:$0xff]
        %v293 = vld [vmem:[#allocation2 + $0x20] sm:$0xff]
        %v294 = vld [vmem:[#allocation2 + $0x28] sm:$0xff]
        %v295 = vld [vmem:[#allocation2 + $0x30] sm:$0xff]
        %v296 = vld [vmem:[#allocation2 + $0x38] sm:$0xff]
        %v297 = vld [vmem:[%s243] sm:$0xf]
        %v298 = vld [vmem:[%s243 + $0x4] sm:$0xf]
        %v299 = vld [vmem:[%s243 + $0x8] sm:$0xf]
        %v300 = vld [vmem:[%s243 + $0xc] sm:$0xf]
        %v301 = vld [vmem:[%s243 + $0x10] sm:$0xf]
        %v302 = vld [vmem:[%s243 + $0x14] sm:$0xf]
        %v303 = vld [vmem:[%s243 + $0x18] sm:$0xf]
        %v304 = vld [vmem:[%s243 + $0x1c] sm:$0xf]
        %v305 = vld [vmem:[#allocation3] sm:$0xf]
        %v306 = vld [vmem:[#allocation3 + $0x4] sm:$0xf]
        %v307 = vld [vmem:[#allocation3 + $0x8] sm:$0xf]
        %v308 = vld [vmem:[#allocation3 + $0xc] sm:$0xf]
        %v309 = vld [vmem:[#allocation3 + $0x10] sm:$0xf]
        %v310 = vld [vmem:[#allocation3 + $0x14] sm:$0xf]
        %v311 = vld [vmem:[#allocation3 + $0x18] sm:$0xf]
        %v312 = vld [vmem:[#allocation3 + $0x1c] sm:$0xf]
        %v313 = vld [vmem:[#allocation3 + $0x20] sm:$0xf]
        %v314 = vld [vmem:[#allocation3 + $0x24] sm:$0xf]
        %v315 = vld [vmem:[#allocation3 + $0x28] sm:$0xf]
        %v316 = vld [vmem:[#allocation3 + $0x2c] sm:$0xf]
        %v317 = vld [vmem:[#allocation3 + $0x30] sm:$0xf]
        %v318 = vld [vmem:[#allocation3 + $0x34] sm:$0xf]
        %v319 = vld [vmem:[#allocation3 + $0x38] sm:$0xf]
        %v320 = vld [vmem:[#allocation3 + $0x3c] sm:$0xf]
        %v329 = vunpack.c.l.b16 %v297
        %v330 = vunpack.c.l.b16 %v298
        %v331 = vunpack.c.l.b16 %v299
        %v332 = vunpack.c.l.b16 %v300
        %v333 = vunpack.c.l.b16 %v301
        %v334 = vunpack.c.l.b16 %v302
        %v335 = vunpack.c.l.b16 %v303
        %v336 = vunpack.c.l.b16 %v304
        %v337 = vpack.c.b16 %v330, %v329
        %v338 = vpack.c.b16 %v332, %v331
        %v339 = vpack.c.b16 %v334, %v333
        %v340 = vpack.c.b16 %v336, %v335
        %v361 = vunpack.c.l.b16 %v305
        %v362 = vunpack.c.l.b16 %v306
        %v363 = vunpack.c.l.b16 %v307
        %v364 = vunpack.c.l.b16 %v308
        %v365 = vunpack.c.l.b16 %v309
        %v366 = vunpack.c.l.b16 %v310
        %v367 = vunpack.c.l.b16 %v311
        %v368 = vunpack.c.l.b16 %v312
        %v369 = vunpack.c.l.b16 %v313
        %v370 = vunpack.c.l.b16 %v314
        %v371 = vunpack.c.l.b16 %v315
        %v372 = vunpack.c.l.b16 %v316
        %v373 = vunpack.c.l.b16 %v317
        %v374 = vunpack.c.l.b16 %v318
        %v375 = vunpack.c.l.b16 %v319
        %v376 = vunpack.c.l.b16 %v320
        %v377 = vpack.c.b16 %v362, %v361
        %v378 = vpack.c.b16 %v364, %v363
        %v379 = vpack.c.b16 %v366, %v365
        %v380 = vpack.c.b16 %v368, %v367
        %v381 = vpack.c.b16 %v370, %v369
        %v382 = vpack.c.b16 %v372, %v371
        %v383 = vpack.c.b16 %v374, %v373
        %v384 = vpack.c.b16 %v376, %v375
        %393 = vmatpush.bf16.msra.mxu0 %v384
        %394 = vmatpush.bf16.msra.mxu0 %v383
        %395 = vmatpush.bf16.msra.mxu0 %v382
        %396 = vmatpush.bf16.msra.mxu0 %v381
        %397 = vmatpush.bf16.msra.mxu0 %v380
        %398 = vmatpush.bf16.msra.mxu0 %v379
        %399 = vmatpush.bf16.msra.mxu0 %v378
        %400 = vmatpush.bf16.msra.mxu0 %v377
        %401 = vmatmul.bf16.gmra.mxu0 %v337
        %v402 = vpop.f32.mrf.mxu0
        %v403 = vadd.f32 0.0, %v402
        %v404 = vpop.f32.mrf.mxu0
        %v405 = vadd.f32 0.0, %v404
        %406 = vmatmul.bf16.gmra.mxu0 %v338
        %v407 = vpop.f32.mrf.mxu0
        %v408 = vadd.f32 0.0, %v407
        %v409 = vpop.f32.mrf.mxu0
        %v410 = vadd.f32 0.0, %v409
        %411 = vmatmul.bf16.gmra.mxu0 %v339
        %v412 = vpop.f32.mrf.mxu0
        %v413 = vadd.f32 0.0, %v412
        %v414 = vpop.f32.mrf.mxu0
        %v415 = vadd.f32 0.0, %v414
        %416 = vmatmul.bf16.gmra.mxu0 %v340
        %v417 = vpop.f32.mrf.mxu0
        %v418 = vadd.f32 0.0, %v417
        %v419 = vpop.f32.mrf.mxu0
        %v420 = vadd.f32 0.0, %v419
        %421 = vdwg.mxu0
        %v422 = vadd.f32 %v289, %v403
        %v423 = vadd.f32 %v290, %v405
        %v424 = vadd.f32 %v291, %v408
        %v425 = vadd.f32 %v292, %v410
        %v426 = vadd.f32 %v293, %v413
        %v427 = vadd.f32 %v294, %v415
        %v428 = vadd.f32 %v295, %v418
        %v429 = vadd.f32 %v296, %v420
        %430 = vst [vmem:[#allocation2] sm:$0xff] %v422
        %431 = vst [vmem:[#allocation2 + $0x8] sm:$0xff] %v423
        %432 = vst [vmem:[#allocation2 + $0x10] sm:$0xff] %v424
        %433 = vst [vmem:[#allocation2 + $0x18] sm:$0xff] %v425
        %434 = vst [vmem:[#allocation2 + $0x20] sm:$0xff] %v426
        %435 = vst [vmem:[#allocation2 + $0x28] sm:$0xff] %v427
        %436 = vst [vmem:[#allocation2 + $0x30] sm:$0xff] %v428
        %437 = vst [vmem:[#allocation2 + $0x38] sm:$0xff] %v429
        // Predicated region
        $region53: #{tpu_custom_call.1} parent=35 // pred_check
          %p438 = pneg %p277
        $region54: #{tpu_custom_call.1} parent=35 // pred_check_branch
          %440 = sbr.rel (%p438) target = $region56
        $region55: #{tpu_custom_call.1} parent=35 // pred_region
          %v441 = vld [vmem:[#allocation2] sm:$0xff]
          %v442 = vld [vmem:[#allocation2 + $0x8] sm:$0xff]
          %v443 = vld [vmem:[#allocation2 + $0x10] sm:$0xff]
          %v444 = vld [vmem:[#allocation2 + $0x18] sm:$0xff]
          %v445 = vld [vmem:[#allocation2 + $0x20] sm:$0xff]
          %v446 = vld [vmem:[#allocation2 + $0x28] sm:$0xff]
          %v447 = vld [vmem:[#allocation2 + $0x30] sm:$0xff]
          %v448 = vld [vmem:[#allocation2 + $0x38] sm:$0xff]
          %v449 = vadd.f32 %v441, 1.0
          %v450 = vadd.f32 %v442, 1.0
          %v451 = vadd.f32 %v443, 1.0
          %v452 = vadd.f32 %v444, 1.0
          %v453 = vadd.f32 %v445, 1.0
          %v454 = vadd.f32 %v446, 1.0
          %v455 = vadd.f32 %v447, 1.0
          %v456 = vadd.f32 %v448, 1.0
          %v457 = vrcp.pop %v449
          %v458 = vrcp.pop %v450
          %v459 = vrcp.pop %v451
          %v460 = vrcp.pop %v452
          %v461 = vrcp.pop %v453
          %v462 = vrcp.pop %v454
          %v463 = vrcp.pop %v455
          %v464 = vrcp.pop %v456
          %v465 = vmul.f32 %v449, %v457
          %v466 = vmul.f32 %v450, %v458
          %v467 = vmul.f32 %v451, %v459
          %v468 = vmul.f32 %v452, %v460
          %v469 = vmul.f32 %v453, %v461
          %v470 = vmul.f32 %v454, %v462
          %v471 = vmul.f32 %v455, %v463
          %v472 = vmul.f32 %v456, %v464
          %v473 = vsub.f32 2.0, %v465
          %v474 = vsub.f32 2.0, %v466
          %v475 = vsub.f32 2.0, %v467
          %v476 = vsub.f32 2.0, %v468
          %v477 = vsub.f32 2.0, %v469
          %v478 = vsub.f32 2.0, %v470
          %v479 = vsub.f32 2.0, %v471
          %v480 = vsub.f32 2.0, %v472
          %v481 = vmul.f32 %v457, %v473
          %v482 = vmul.f32 %v458, %v474
          %v483 = vmul.f32 %v459, %v475
          %v484 = vmul.f32 %v460, %v476
          %v485 = vmul.f32 %v461, %v477
          %v486 = vmul.f32 %v462, %v478
          %v487 = vmul.f32 %v463, %v479
          %v488 = vmul.f32 %v464, %v480
          %490 = vset.pattern.permute.xlu0 32
          %491 = vperm.xlu0 %490, %v481
          %v492 = vpop.permute.xlu0 %491
          %495 = vset.pattern.permute.xlu0 32
          %496 = vperm.xlu0 %495, %v482
          %v497 = vpop.permute.xlu0 %496
          %500 = vset.pattern.permute.xlu0 32
          %501 = vperm.xlu0 %500, %v483
          %v502 = vpop.permute.xlu0 %501
          %505 = vset.pattern.permute.xlu0 32
          %506 = vperm.xlu0 %505, %v484
          %v507 = vpop.permute.xlu0 %506
          %510 = vset.pattern.permute.xlu0 32
          %511 = vperm.xlu0 %510, %v485
          %v512 = vpop.permute.xlu0 %511
          %515 = vset.pattern.permute.xlu0 32
          %516 = vperm.xlu0 %515, %v486
          %v517 = vpop.permute.xlu0 %516
          %520 = vset.pattern.permute.xlu0 32
          %521 = vperm.xlu0 %520, %v487
          %v522 = vpop.permute.xlu0 %521
          %525 = vset.pattern.permute.xlu0 32
          %526 = vperm.xlu0 %525, %v488
          %v527 = vpop.permute.xlu0 %526
          %v529 = vmul.f32 %v441, %v492
          %v530 = vmul.f32 %v442, %v497
          %v531 = vmul.f32 %v443, %v502
          %v532 = vmul.f32 %v444, %v507
          %v533 = vmul.f32 %v445, %v512
          %v534 = vmul.f32 %v446, %v517
          %v535 = vmul.f32 %v447, %v522
          %v536 = vmul.f32 %v448, %v527
          %v537 = vpack.c.bf16 %v530, %v529
          %v538 = vpack.c.bf16 %v532, %v531
          %v539 = vpack.c.bf16 %v534, %v533
          %v540 = vpack.c.bf16 %v536, %v535
          %v541 = vld [vmem:[#allocation8] sm:$0xf]
          %v542 = vld [vmem:[#allocation8 + $0x4] sm:$0xf]
          %v543 = vld [vmem:[#allocation8 + $0x8] sm:$0xf]
          %v544 = vld [vmem:[#allocation8 + $0xc] sm:$0xf]
          %v545 = vld [vmem:[#allocation8 + $0x10] sm:$0xf]
          %v546 = vld [vmem:[#allocation8 + $0x14] sm:$0xf]
          %v547 = vld [vmem:[#allocation8 + $0x18] sm:$0xf]
          %v548 = vld [vmem:[#allocation8 + $0x1c] sm:$0xf]
          %v549 = vld [vmem:[#allocation8 + $0x20] sm:$0xf]
          %v550 = vld [vmem:[#allocation8 + $0x24] sm:$0xf]
          %v551 = vld [vmem:[#allocation8 + $0x28] sm:$0xf]
          %v552 = vld [vmem:[#allocation8 + $0x2c] sm:$0xf]
          %v553 = vld [vmem:[#allocation8 + $0x30] sm:$0xf]
          %v554 = vld [vmem:[#allocation8 + $0x34] sm:$0xf]
          %v555 = vld [vmem:[#allocation8 + $0x38] sm:$0xf]
          %v556 = vld [vmem:[#allocation8 + $0x3c] sm:$0xf]
          %v557 = vld [vmem:[%s3] sm:$0x1]
          %v559 = vperm.slane %v557, 0
          %v577 = vunpack.c.l.b16 %v541
          %v578 = vunpack.c.l.b16 %v542
          %v579 = vunpack.c.l.b16 %v543
          %v580 = vunpack.c.l.b16 %v544
          %v581 = vunpack.c.l.b16 %v545
          %v582 = vunpack.c.l.b16 %v546
          %v583 = vunpack.c.l.b16 %v547
          %v584 = vunpack.c.l.b16 %v548
          %v585 = vunpack.c.l.b16 %v549
          %v586 = vunpack.c.l.b16 %v550
          %v587 = vunpack.c.l.b16 %v551
          %v588 = vunpack.c.l.b16 %v552
          %v589 = vunpack.c.l.b16 %v553
          %v590 = vunpack.c.l.b16 %v554
          %v591 = vunpack.c.l.b16 %v555
          %v592 = vunpack.c.l.b16 %v556
          %v593 = vpack.c.b16 %v578, %v577
          %v594 = vpack.c.b16 %v580, %v579
          %v595 = vpack.c.b16 %v582, %v581
          %v596 = vpack.c.b16 %v584, %v583
          %v597 = vpack.c.b16 %v586, %v585
          %v598 = vpack.c.b16 %v588, %v587
          %v599 = vpack.c.b16 %v590, %v589
          %v600 = vpack.c.b16 %v592, %v591
          %609 = vmatpush.bf16.msra.mxu0 %v600
          %610 = vmatpush.bf16.msra.mxu0 %v599
          %611 = vmatpush.bf16.msra.mxu0 %v598
          %612 = vmatpush.bf16.msra.mxu0 %v597
          %613 = vmatpush.bf16.msra.mxu0 %v596
          %614 = vmatpush.bf16.msra.mxu0 %v595
          %615 = vmatpush.bf16.msra.mxu0 %v594
          %616 = vmatpush.bf16.msra.mxu0 %v593
          %617 = vmatmul.bf16.gmra.mxu0 %v537
          %v618 = vpop.f32.mrf.mxu0
          %v619 = vadd.f32 %v559, %v618
          %v620 = vpop.f32.mrf.mxu0
          %v621 = vadd.f32 %v559, %v620
          %622 = vmatmul.bf16.gmra.mxu0 %v538
          %v623 = vpop.f32.mrf.mxu0
          %v624 = vadd.f32 %v559, %v623
          %v625 = vpop.f32.mrf.mxu0
          %v626 = vadd.f32 %v559, %v625
          %627 = vmatmul.bf16.gmra.mxu0 %v539
          %v628 = vpop.f32.mrf.mxu0
          %v629 = vadd.f32 %v559, %v628
          %v630 = vpop.f32.mrf.mxu0
          %v631 = vadd.f32 %v559, %v630
          %632 = vmatmul.bf16.gmra.mxu0 %v540
          %v633 = vpop.f32.mrf.mxu0
          %v634 = vadd.f32 %v559, %v633
          %v635 = vpop.f32.mrf.mxu0
          %v636 = vadd.f32 %v559, %v635
          %637 = vdwg.mxu0
          %638 = vst [vmem:[%s273] sm:$0xff] %v619
          %639 = vst [vmem:[%s273 + $0x8] sm:$0xff] %v621
          %640 = vst [vmem:[%s273 + $0x10] sm:$0xff] %v624
          %641 = vst [vmem:[%s273 + $0x18] sm:$0xff] %v626
          %642 = vst [vmem:[%s273 + $0x20] sm:$0xff] %v629
          %643 = vst [vmem:[%s273 + $0x28] sm:$0xff] %v631
          %644 = vst [vmem:[%s273 + $0x30] sm:$0xff] %v634
          %645 = vst [vmem:[%s273 + $0x38] sm:$0xff] %v636
        $region56: #{tpu_custom_call.1} parent=35 // pred_fallthru
          _
        %s646 = sand.u32 %s138, 1
        %s647 = scalar_lea.sflag [#allocation5], %s646
        %s648 = sand.u32 %s138, 1
        %s649 = smul.addr %s648, 64
        %s650 = scalar_lea.vmem [#allocation9], %s649
        // Predicated region
        $region57: #{tpu_custom_call.1} parent=35 // pred_check
          %p651 = pneg %p148
        $region58: #{tpu_custom_call.1} parent=35 // pred_check_branch
          %653 = sbr.rel (%p651) target = $region60
        $region59: #{tpu_custom_call.1} parent=35 // pred_region
          %s654 = smul.u32 8, %s26
          %656 = vsyncadd %s647, 0
          %s657 = smul.addr %s654, 8
          %s658 = scalar_lea.hbm %s4, %s657
          %s659 = sshll.u32 %s650, 4
          %s660 = int_to_ptr.vmem [resolvable:$true] %s659
          %s661 = sshll.u32 %s658, 4
          %s662 = int_to_ptr.hbm [resolvable:$true] %s661
          %667 = dma.vmem_to_hbm [thread:$0]  %s660, 1024, %s662, %s647, 128, 128, 8
        $region60: #{tpu_custom_call.1} parent=35 // pred_fallthru
          _
      $region36: #{tpu_custom_call.1} parent=5 // pred_fallthru
        _
      %p668 = scmp.le.s32.totalorder 2, %s17
      // Predicated region
      $region61: #{tpu_custom_call.1} parent=5 // pred_check
        %p669 = pneg %p668
      $region62: #{tpu_custom_call.1} parent=5 // pred_check_branch
        %671 = sbr.rel (%p669) target = $region64
      $region63: #{tpu_custom_call.1} parent=5 // pred_region
        %s672 = ssub.s32 %s17, 2
        // Predicated region
        $region65: #{tpu_custom_call.1} parent=63 // pred_check
          %p673 = pneg %p154
        $region66: #{tpu_custom_call.1} parent=63 // pred_check_branch
          %675 = sbr.rel (%p673) target = $region68
        $region67: #{tpu_custom_call.1} parent=63 // pred_region
          %s676 = sand.u32 %s139, 1
          %s677 = scalar_lea.sflag [#allocation5], %s676
          %s678 = sand.u32 %s139, 1
          %s679 = smul.addr %s678, 64
          %s680 = scalar_lea.vmem [#allocation9], %s679
          %682 = dma.done %s677, 1024
        $region68: #{tpu_custom_call.1} parent=63 // pred_fallthru
          _
      $region64: #{tpu_custom_call.1} parent=5 // pred_fallthru
        _
    $region6: #{tpu_custom_call.1} parent=1 // loop_footer
      %s21 = sadd.s32 1, %s17
    $region7: #{tpu_custom_call.1} parent=1 // loop_footer_branch
      %16 = sbr.rel target = $region3
    $region8: #{tpu_custom_call.1} parent=1 // loop_exit
      _
    %683 = vsyncpa [#allocation4], 1
    %s684 = scalar_lea.sflag [#allocation4], 1
    %685 = vsyncpa %s684, 1
    %686 = vsyncpa [#allocation7], 1
    %s687 = scalar_lea.sflag [#allocation7], 1
    %688 = vsyncpa %s687, 1
    %689 = vsyncpa [#allocation5], 1
    %s690 = scalar_lea.sflag [#allocation5], 1
    %691 = vsyncpa %s690, 1

</llo_original>
